<compile_context>
chip_gen: v7x
topology: tpu7x:2x2x1
jax: 0.10.0
libtpu: 0.0.40
codegen_flags: <defaults>
</compile_context>

<pallas_src>
import jax
import jax.numpy as jnp
from jax.experimental import pallas as pl
from jax.experimental.pallas import tpu as pltpu

IN_FEATURES = 28 * 28      # 784
H1, H2 = 64, 32
OUT_FEATURES = 10
MAX_TB = 1024              # batch-tile cap (f32 x tile: 1024*784*4 ~ 3.2 MiB)


def mlp_kernel(x_ref, w1_ref, b1_ref, w2_ref, b2_ref, w3_ref, b3_ref, o_ref):
    # fc1: dominant matmul. Cast the streamed f32 tile to bf16 on-chip (VPU),
    # single MXU pass with f32 accumulation; bias + relu in f32.
    x = x_ref[...].astype(jnp.bfloat16)
    h1 = jnp.dot(x, w1_ref[...], preferred_element_type=jnp.float32)
    h1 = jnp.maximum(h1 + b1_ref[...], 0.0)
    # fc2 + relu (tiny matmul, negligible cost).
    h2 = jnp.dot(h1, w2_ref[...], preferred_element_type=jnp.float32)
    h2 = jnp.maximum(h2 + b2_ref[...], 0.0)
    # fc3 (no activation); narrow (TB, 10) store — HBM write traffic is tiny.
    h3 = jnp.dot(h2, w3_ref[...], preferred_element_type=jnp.float32)
    o_ref[...] = (h3 + b3_ref[...]).astype(o_ref.dtype)


def _round_up(x, m):
    return ((x + m - 1) // m) * m


@jax.jit
def net_forward(x, params):
    """x: any shape with trailing 28*28 elements per sample (e.g. [B,1,28,28])."""
    w1, b1, w2, b2, w3, b3 = params
    x2d = x.reshape(-1, IN_FEATURES).astype(jnp.float32)   # free under jit
    B = x2d.shape[0]

    # Batch tile: multiple of 8 (sublane), capped at MAX_TB. Uneven last block
    # is handled by Pallas (OOB reads are discarded via masked output writes).
    TB = min(MAX_TB, _round_up(max(B, 1), 8))
    grid = (pl.cdiv(B, TB),)

    # Weights are [in, out] so the kernel computes y = x @ W + b (== torch W^T).
    w1b = w1.astype(jnp.bfloat16)           # only non-trivial weight -> bf16
    w2f = w2.astype(jnp.float32)
    w3f = w3.astype(jnp.float32)
    b1f = b1.astype(jnp.float32)
    b2f = b2.astype(jnp.float32)
    b3f = b3.astype(jnp.float32)

    resident = lambda i: (0, 0)  # weights/biases: same block every grid step
    in_specs = [
        pl.BlockSpec((TB, IN_FEATURES), lambda i: (i, 0)),  # x (streamed)
        pl.BlockSpec((IN_FEATURES, H1), resident),          # w1 (bf16)
        pl.BlockSpec((1, H1), resident),                    # b1
        pl.BlockSpec((H1, H2), resident),                   # w2
        pl.BlockSpec((1, H2), resident),                    # b2
        pl.BlockSpec((H2, OUT_FEATURES), resident),         # w3
        pl.BlockSpec((1, OUT_FEATURES), resident),          # b3
    ]
    out_spec = pl.BlockSpec((TB, OUT_FEATURES), lambda i: (i, 0))

    flops = 2 * B * (IN_FEATURES * H1 + H1 * H2 + H2 * OUT_FEATURES)
    bytes_accessed = (
        B * IN_FEATURES * 4                       # x (f32, streamed once)
        + IN_FEATURES * H1 * 2                    # w1 (bf16)
        + (H1 * H2 + H2 * OUT_FEATURES) * 4       # w2, w3
        + (H1 + H2 + OUT_FEATURES) * 4            # biases
        + B * OUT_FEATURES * 4                    # output
    )
    cost = pl.CostEstimate(flops=flops, transcendentals=0,
                           bytes_accessed=bytes_accessed)

    out = pl.pallas_call(
        mlp_kernel,
        out_shape=jax.ShapeDtypeStruct((B, OUT_FEATURES), jnp.float32),
        grid=grid,
        in_specs=in_specs,
        out_specs=out_spec,
        compiler_params=pltpu.CompilerParams(
            dimension_semantics=("parallel",)),
        cost_estimate=cost,
    )(x2d, w1b, b1f, w2f, b2f, w3f, b3f)

    return out


def init_params(key):
    """Deterministic init mirroring nn.Linear shapes; weights stored as [in, out]."""
    k1, k2, k3, k4, k5, k6 = jax.random.split(key, 6)

    def linear(kw, kb, fan_in, fan_out):
        bound = 1.0 / jnp.sqrt(fan_in)
        w = jax.random.uniform(kw, (fan_in, fan_out), jnp.float32, -bound, bound)
        b = jax.random.uniform(kb, (1, fan_out), jnp.float32, -bound, bound)
        return w, b

    w1, b1 = linear(k1, k2, IN_FEATURES, H1)
    w2, b2 = linear(k3, k4, H1, H2)
    w3, b3 = linear(k5, k6, H2, OUT_FEATURES)
    return (w1, b1, w2, b2, w3, b3)


def reference_forward(x, params):
    """Pure-JAX reference mirroring the kernel's bf16 quantization of x/w1."""
    w1, b1, w2, b2, w3, b3 = params
    x2d = x.reshape(-1, IN_FEATURES).astype(jnp.bfloat16)
    h1 = jnp.dot(x2d, w1.astype(jnp.bfloat16),
                 preferred_element_type=jnp.float32) + b1
    h1 = jnp.maximum(h1, 0.0)
    h2 = jnp.maximum(h1 @ w2 + b2, 0.0)
    return h2 @ w3 + b3


if __name__ == "__main__":
    key = jax.random.PRNGKey(0)
    kx, kp, kx2 = jax.random.split(key, 3)
    params = init_params(kp)

    # Small MNIST-shaped batch (NCHW), flattened inside the wrapper.
    x = jax.random.normal(kx, (2, 1, 28, 28), dtype=jnp.float32)
    out = jax.block_until_ready(net_forward(x, params))
    ref = reference_forward(x, params)
    assert out.shape == (2, 10)
    assert jnp.allclose(out, ref, atol=1e-3, rtol=1e-3)

    # Second case: batch not divisible by the tile -> multi-step grid with a
    # masked boundary block (1050 rows, TB=1024 -> 2 grid steps).
    x_big = jax.random.normal(kx2, (1050, 1, 28, 28), dtype=jnp.float32)
    out_big = jax.block_until_ready(net_forward(x_big, params))
    ref_big = reference_forward(x_big, params)
    assert out_big.shape == (1050, 10)
    assert jnp.allclose(out_big, ref_big, atol=1e-3, rtol=1e-3)

    print("KERNEL_OK")
</pallas_src>

<mosaic_0001>
module attributes {stable_mosaic.version = 11 : i64} {
  func.func @mlp_kernel(%arg0: i32, %arg1: memref<8x784xf32, #tpu.memory_space<vmem>>, %arg2: memref<784x64xbf16, #tpu.memory_space<vmem>>, %arg3: memref<1x64xf32, #tpu.memory_space<vmem>>, %arg4: memref<64x32xf32, #tpu.memory_space<vmem>>, %arg5: memref<1x32xf32, #tpu.memory_space<vmem>>, %arg6: memref<32x10xf32, #tpu.memory_space<vmem>>, %arg7: memref<1x10xf32, #tpu.memory_space<vmem>>, %arg8: memref<8x10xf32, #tpu.memory_space<vmem>>) attributes {dimension_semantics = [#tpu.dimension_semantics<parallel>], iteration_bounds = array<i64: 1>, scalar_prefetch = 0 : i64, scratch_operands = 0 : i64, tpu.core_type = #tpu.core_type<tc>, window_params = [{transform_indices = @transform_0, window_bounds = array<i64: 8, 784>}, {pipeline_mode = #tpu.pipeline_mode<synchronous>, transform_indices = @transform_1, window_bounds = array<i64: 784, 64>}, {pipeline_mode = #tpu.pipeline_mode<synchronous>, transform_indices = @transform_2, window_bounds = array<i64: 1, 64>}, {pipeline_mode = #tpu.pipeline_mode<synchronous>, transform_indices = @transform_3, window_bounds = array<i64: 64, 32>}, {pipeline_mode = #tpu.pipeline_mode<synchronous>, transform_indices = @transform_4, window_bounds = array<i64: 1, 32>}, {pipeline_mode = #tpu.pipeline_mode<synchronous>, transform_indices = @transform_5, window_bounds = array<i64: 32, 10>}, {pipeline_mode = #tpu.pipeline_mode<synchronous>, transform_indices = @transform_6, window_bounds = array<i64: 1, 10>}, {transform_indices = @transform_7, window_bounds = array<i64: 8, 10>}]} {
    %c0 = arith.constant 0 : index
    %c0_0 = arith.constant 0 : index
    %0 = vector.load %arg1[%c0, %c0_0] : memref<8x784xf32, #tpu.memory_space<vmem>>, vector<8x784xf32>
    %1 = arith.truncf %0 : vector<8x784xf32> to vector<8x784xbf16>
    %c0_1 = arith.constant 0 : index
    %c0_2 = arith.constant 0 : index
    %2 = vector.load %arg2[%c0_1, %c0_2] : memref<784x64xbf16, #tpu.memory_space<vmem>>, vector<784x64xbf16>
    %cst = arith.constant dense<0.000000e+00> : vector<8x64xf32>
    %3 = tpu.matmul %1, %2, %cst {dimension_numbers = #tpu.dot_dimension_numbers<[1], [0], [0], [1], [0, 0, 1, 1], [], []>} : vector<8x784xbf16>, vector<784x64xbf16>, vector<8x64xf32> -> vector<8x64xf32>
    %c0_3 = arith.constant 0 : index
    %c0_4 = arith.constant 0 : index
    %4 = vector.load %arg3[%c0_3, %c0_4] : memref<1x64xf32, #tpu.memory_space<vmem>>, vector<1x64xf32>
    %5 = vector.broadcast %4 : vector<1x64xf32> to vector<8x64xf32>
    %6 = arith.addf %3, %5 : vector<8x64xf32>
    %cst_5 = arith.constant 0.000000e+00 : f32
    %7 = vector.broadcast %cst_5 : f32 to vector<8x64xf32>
    %8 = arith.maximumf %6, %7 : vector<8x64xf32>
    %c0_6 = arith.constant 0 : index
    %c0_7 = arith.constant 0 : index
    %9 = vector.load %arg4[%c0_6, %c0_7] : memref<64x32xf32, #tpu.memory_space<vmem>>, vector<64x32xf32>
    %cst_8 = arith.constant dense<0.000000e+00> : vector<8x32xf32>
    %10 = tpu.matmul %8, %9, %cst_8 {dimension_numbers = #tpu.dot_dimension_numbers<[1], [0], [0], [1], [0, 0, 1, 1], [], []>} : vector<8x64xf32>, vector<64x32xf32>, vector<8x32xf32> -> vector<8x32xf32>
    %c0_9 = arith.constant 0 : index
    %c0_10 = arith.constant 0 : index
    %11 = vector.load %arg5[%c0_9, %c0_10] : memref<1x32xf32, #tpu.memory_space<vmem>>, vector<1x32xf32>
    %12 = vector.broadcast %11 : vector<1x32xf32> to vector<8x32xf32>
    %13 = arith.addf %10, %12 : vector<8x32xf32>
    %cst_11 = arith.constant 0.000000e+00 : f32
    %14 = vector.broadcast %cst_11 : f32 to vector<8x32xf32>
    %15 = arith.maximumf %13, %14 : vector<8x32xf32>
    %c0_12 = arith.constant 0 : index
    %c0_13 = arith.constant 0 : index
    %16 = vector.load %arg6[%c0_12, %c0_13] : memref<32x10xf32, #tpu.memory_space<vmem>>, vector<32x10xf32>
    %cst_14 = arith.constant dense<0.000000e+00> : vector<8x10xf32>
    %17 = tpu.matmul %15, %16, %cst_14 {dimension_numbers = #tpu.dot_dimension_numbers<[1], [0], [0], [1], [0, 0, 1, 1], [], []>} : vector<8x32xf32>, vector<32x10xf32>, vector<8x10xf32> -> vector<8x10xf32>
    %c0_15 = arith.constant 0 : index
    %c0_16 = arith.constant 0 : index
    %18 = vector.load %arg7[%c0_15, %c0_16] : memref<1x10xf32, #tpu.memory_space<vmem>>, vector<1x10xf32>
    %19 = vector.broadcast %18 : vector<1x10xf32> to vector<8x10xf32>
    %20 = arith.addf %17, %19 : vector<8x10xf32>
    %c0_17 = arith.constant 0 : index
    %c0_18 = arith.constant 0 : index
    %21 = vector.load %arg8[%c0_17, %c0_18] : memref<8x10xf32, #tpu.memory_space<vmem>>, vector<8x10xf32>
    tpu.vector_store %arg8[%c0_17, %c0_18], %20 {strides = array<i32>} : memref<8x10xf32, #tpu.memory_space<vmem>>, vector<8x10xf32>,
    return
  }
  func.func @transform_0(%arg0: i32) -> (i32, i32) {
    %c0_i32 = arith.constant 0 : i32
    %c0_i32_0 = arith.constant 0 : i32
    return %arg0, %c0_i32 : i32, i32
  }
  func.func @transform_1(%arg0: i32) -> (i32, i32) {
    %c0_i32 = arith.constant 0 : i32
    %c0_i32_0 = arith.constant 0 : i32
    %c0_i32_1 = arith.constant 0 : i32
    return %c0_i32, %c0_i32_0 : i32, i32
  }
  func.func @transform_2(%arg0: i32) -> (i32, i32) {
    %c0_i32 = arith.constant 0 : i32
    %c0_i32_0 = arith.constant 0 : i32
    %c0_i32_1 = arith.constant 0 : i32
    return %c0_i32, %c0_i32_0 : i32, i32
  }
  func.func @transform_3(%arg0: i32) -> (i32, i32) {
    %c0_i32 = arith.constant 0 : i32
    %c0_i32_0 = arith.constant 0 : i32
    %c0_i32_1 = arith.constant 0 : i32
    return %c0_i32, %c0_i32_0 : i32, i32
  }
  func.func @transform_4(%arg0: i32) -> (i32, i32) {
    %c0_i32 = arith.constant 0 : i32
    %c0_i32_0 = arith.constant 0 : i32
    %c0_i32_1 = arith.constant 0 : i32
    return %c0_i32, %c0_i32_0 : i32, i32
  }
  func.func @transform_5(%arg0: i32) -> (i32, i32) {
    %c0_i32 = arith.constant 0 : i32
    %c0_i32_0 = arith.constant 0 : i32
    %c0_i32_1 = arith.constant 0 : i32
    return %c0_i32, %c0_i32_0 : i32, i32
  }
  func.func @transform_6(%arg0: i32) -> (i32, i32) {
    %c0_i32 = arith.constant 0 : i32
    %c0_i32_0 = arith.constant 0 : i32
    %c0_i32_1 = arith.constant 0 : i32
    return %c0_i32, %c0_i32_0 : i32, i32
  }
  func.func @transform_7(%arg0: i32) -> (i32, i32) {
    %c0_i32 = arith.constant 0 : i32
    %c0_i32_0 = arith.constant 0 : i32
    return %arg0, %c0_i32 : i32, i32
  }
}

</mosaic_0001>

<llo_original>
// kernel: net_forward.1
$region0: #{net_forward.1}
  #allocation0 [shape = 'u32[]', space=smem, size = 0x4, offset = 0x4, fixed_abs, tag = 'smem constant byte address 0x4 - core index']
  #allocation1 [shape = 'u32[144,128]{1,0:T(1,128)}', space=vmem, size = 0x12000, scoped, tag = 'internal scratch']
  %s0 = inlined_call_operand.vmem [shape: f32[2,784], index: 0, kind: input, shape index: {}]
  %s1 = inlined_call_operand.vmem [shape: bf16[784,64], index: 1, kind: input, shape index: {}]
  %s2 = inlined_call_operand.vmem [shape: f32[1,64], index: 2, kind: input, shape index: {}]
  %s3 = inlined_call_operand.vmem [shape: f32[64,32], index: 3, kind: input, shape index: {}]
  %s4 = inlined_call_operand.vmem [shape: f32[1,32], index: 4, kind: input, shape index: {}]
  %s5 = inlined_call_operand.vmem [shape: f32[32,10], index: 5, kind: input, shape index: {}]
  %s6 = inlined_call_operand.vmem [shape: f32[1,10], index: 6, kind: input, shape index: {}]
  %s7 = inlined_call_operand.hbm [shape: f32[2,10], index: 7, kind: output, shape index: {}]
  %s8 = sld [smem:[#allocation0]]
  $region38: #{net_forward.1} parent=0
    _
  %s10 = ssub.s32 1, %s8
  %s11 = scalar_select 0, %s10, %s8
  $region1: #{net_forward.1} parent=0
    #allocation2 [shape = 'u8[4096]{0}', space=vmem, size = 0x1000, scoped, tag = 'output window, operand 0, single buffered']
    #allocation3 [shape = 's32[1]{0}', space=sflag, size = 0x4, scoped, tag = 'scoped memory for net_forward.1']
    %12 = vsyncpa [#allocation3], 0
    // Predicated region
    $region2: #{net_forward.1} parent=1 // pred_check
      _
    $region3: #{net_forward.1} parent=1 // pred_check_branch
      %14 = sbr.rel (0) target = $region5
    $region4: #{net_forward.1} parent=1 // pred_region
      _
    $region5: #{net_forward.1} parent=1 // pred_fallthru
      _
    // Predicated region
    $region6: #{net_forward.1} parent=1 // pred_check
      _
    $region7: #{net_forward.1} parent=1 // pred_check_branch
      %16 = sbr.rel (0) target = $region9
    $region8: #{net_forward.1} parent=1 // pred_region
      _
    $region9: #{net_forward.1} parent=1 // pred_fallthru
      _
    // Predicated region
    $region10: #{net_forward.1} parent=1 // pred_check
      _
    $region11: #{net_forward.1} parent=1 // pred_check_branch
      %18 = sbr.rel (0) target = $region13
    $region12: #{net_forward.1} parent=1 // pred_region
      _
    $region13: #{net_forward.1} parent=1 // pred_fallthru
      _
    // Predicated region
    $region14: #{net_forward.1} parent=1 // pred_check
      _
    $region15: #{net_forward.1} parent=1 // pred_check_branch
      %20 = sbr.rel (0) target = $region17
    $region16: #{net_forward.1} parent=1 // pred_region
      _
    $region17: #{net_forward.1} parent=1 // pred_fallthru
      _
    // Predicated region
    $region18: #{net_forward.1} parent=1 // pred_check
      _
    $region19: #{net_forward.1} parent=1 // pred_check_branch
      %22 = sbr.rel (0) target = $region21
    $region20: #{net_forward.1} parent=1 // pred_region
      _
    $region21: #{net_forward.1} parent=1 // pred_fallthru
      _
    // Predicated region
    $region22: #{net_forward.1} parent=1 // pred_check
      _
    $region23: #{net_forward.1} parent=1 // pred_check_branch
      %24 = sbr.rel (0) target = $region25
    $region24: #{net_forward.1} parent=1 // pred_region
      _
    $region25: #{net_forward.1} parent=1 // pred_fallthru
      _
    // Predicated region
    $region26: #{net_forward.1} parent=1 // pred_check
      _
    $region27: #{net_forward.1} parent=1 // pred_check_branch
      %26 = sbr.rel (0) target = $region29
    $region28: #{net_forward.1} parent=1 // pred_region
      _
    $region29: #{net_forward.1} parent=1 // pred_fallthru
      _
    %v28 = vld [vmem:[%s0] sm:$0xff]
    %v29 = vld [vmem:[%s0 + $0x8] sm:$0x3f]
    %v30 = vld [vmem:[%s0 + $0xe] sm:$0xff]
    %v31 = vld [vmem:[%s0 + $0x16] sm:$0x3f]
    %v32 = vld [vmem:[%s0 + $0x1c] sm:$0xff]
    %v33 = vld [vmem:[%s0 + $0x24] sm:$0x3f]
    %v34 = vld [vmem:[%s0 + $0x2a] sm:$0xff]
    %v35 = vld [vmem:[%s0 + $0x32] sm:$0x3f]
    %v44 = vcombine.low %v28, %v30
    %v45 = vcombine.high %v28, %v30
    %v46 = vcombine.low %v32, %v34
    %v47 = vcombine.high %v32, %v34
    %v49 = vunpack.c.l.s4 1983009808
    %v50 = vunpack.c.0.s8 %v49
    %v51 = vlaneseq
    %v52 = vshrl.u32 %v51, 7
    %v53 = vsub.s32 %v50, %v52
    %v54 = vrot.slane %v44, %v53
    %v56 = vunpack.c.l.s4 1983009808
    %v57 = vunpack.c.0.s8 %v56
    %v58 = vlaneseq
    %v59 = vshrl.u32 %v58, 7
    %v60 = vsub.s32 %v57, %v59
    %v61 = vrot.slane %v45, %v60
    %v63 = vunpack.c.l.s4 1983009808
    %v64 = vunpack.c.0.s8 %v63
    %v65 = vlaneseq
    %v66 = vshrl.u32 %v65, 7
    %v67 = vsub.s32 %v64, %v66
    %v68 = vrot.slane %v46, %v67
    %v70 = vunpack.c.l.s4 1983009808
    %v71 = vunpack.c.0.s8 %v70
    %v72 = vlaneseq
    %v73 = vshrl.u32 %v72, 7
    %v74 = vsub.s32 %v71, %v73
    %v75 = vrot.slane %v47, %v74
    %v76 = vcombine.low %v54, %v68
    %v77 = vcombine.high %v54, %v68
    %v78 = vcombine.low %v61, %v75
    %v79 = vcombine.high %v61, %v75
    %v80 = vcombine.low %v29, %v31
    %v81 = vcombine.high %v29, %v31
    %v82 = vcombine.low %v33, %v35
    %v83 = vcombine.high %v33, %v35
    %v85 = vunpack.c.l.s4 1983009808
    %v86 = vunpack.c.0.s8 %v85
    %v87 = vlaneseq
    %v88 = vshrl.u32 %v87, 7
    %v89 = vsub.s32 %v86, %v88
    %v90 = vrot.slane %v80, %v89
    %v92 = vunpack.c.l.s4 1983009808
    %v93 = vunpack.c.0.s8 %v92
    %v94 = vlaneseq
    %v95 = vshrl.u32 %v94, 7
    %v96 = vsub.s32 %v93, %v95
    %v97 = vrot.slane %v81, %v96
    %v99 = vunpack.c.l.s4 1983009808
    %v100 = vunpack.c.0.s8 %v99
    %v101 = vlaneseq
    %v102 = vshrl.u32 %v101, 7
    %v103 = vsub.s32 %v100, %v102
    %v104 = vrot.slane %v82, %v103
    %v106 = vunpack.c.l.s4 1983009808
    %v107 = vunpack.c.0.s8 %v106
    %v108 = vlaneseq
    %v109 = vshrl.u32 %v108, 7
    %v110 = vsub.s32 %v107, %v109
    %v111 = vrot.slane %v83, %v110
    %v112 = vcombine.low %v90, %v104
    %v113 = vcombine.high %v90, %v104
    %v114 = vcombine.low %v97, %v111
    %v122 = vpack.c.bf16 %v76, %v76
    %v123 = vpack.c.bf16 %v77, %v77
    %v124 = vpack.c.bf16 %v78, %v78
    %v125 = vpack.c.bf16 %v79, %v79
    %v126 = vpack.c.bf16 %v112, %v112
    %v127 = vpack.c.bf16 %v113, %v113
    %v128 = vpack.c.bf16 %v114, %v114
    %v129 = vld [vmem:[%s1] sm:$0xf]
    %v130 = vld [vmem:[%s1 + $0x4] sm:$0xf]
    %v131 = vld [vmem:[%s1 + $0x8] sm:$0xf]
    %v132 = vld [vmem:[%s1 + $0xc] sm:$0xf]
    %v133 = vld [vmem:[%s1 + $0x10] sm:$0xf]
    %v134 = vld [vmem:[%s1 + $0x14] sm:$0xf]
    %v135 = vld [vmem:[%s1 + $0x18] sm:$0xf]
    %v136 = vld [vmem:[%s1 + $0x1c] sm:$0xf]
    %v137 = vld [vmem:[%s1 + $0x20] sm:$0xf]
    %v138 = vld [vmem:[%s1 + $0x24] sm:$0xf]
    %v139 = vld [vmem:[%s1 + $0x28] sm:$0xf]
    %v140 = vld [vmem:[%s1 + $0x2c] sm:$0xf]
    %v141 = vld [vmem:[%s1 + $0x30] sm:$0xf]
    %v142 = vld [vmem:[%s1 + $0x34] sm:$0xf]
    %v143 = vld [vmem:[%s1 + $0x38] sm:$0xf]
    %v144 = vld [vmem:[%s1 + $0x3c] sm:$0xf]
    %v145 = vld [vmem:[%s1 + $0x40] sm:$0xf]
    %v146 = vld [vmem:[%s1 + $0x44] sm:$0xf]
    %v147 = vld [vmem:[%s1 + $0x48] sm:$0xf]
    %v148 = vld [vmem:[%s1 + $0x4c] sm:$0xf]
    %v149 = vld [vmem:[%s1 + $0x50] sm:$0xf]
    %v150 = vld [vmem:[%s1 + $0x54] sm:$0xf]
    %v151 = vld [vmem:[%s1 + $0x58] sm:$0xf]
    %v152 = vld [vmem:[%s1 + $0x5c] sm:$0xf]
    %v153 = vld [vmem:[%s1 + $0x60] sm:$0xf]
    %v154 = vld [vmem:[%s1 + $0x64] sm:$0xf]
    %v155 = vld [vmem:[%s1 + $0x68] sm:$0xf]
    %v156 = vld [vmem:[%s1 + $0x6c] sm:$0xf]
    %v157 = vld [vmem:[%s1 + $0x70] sm:$0xf]
    %v158 = vld [vmem:[%s1 + $0x74] sm:$0xf]
    %v159 = vld [vmem:[%s1 + $0x78] sm:$0xf]
    %v160 = vld [vmem:[%s1 + $0x7c] sm:$0xf]
    %v161 = vld [vmem:[%s1 + $0x80] sm:$0xf]
    %v162 = vld [vmem:[%s1 + $0x84] sm:$0xf]
    %v163 = vld [vmem:[%s1 + $0x88] sm:$0xf]
    %v164 = vld [vmem:[%s1 + $0x8c] sm:$0xf]
    %v165 = vld [vmem:[%s1 + $0x90] sm:$0xf]
    %v166 = vld [vmem:[%s1 + $0x94] sm:$0xf]
    %v167 = vld [vmem:[%s1 + $0x98] sm:$0xf]
    %v168 = vld [vmem:[%s1 + $0x9c] sm:$0xf]
    %v169 = vld [vmem:[%s1 + $0xa0] sm:$0xf]
    %v170 = vld [vmem:[%s1 + $0xa4] sm:$0xf]
    %v171 = vld [vmem:[%s1 + $0xa8] sm:$0xf]
    %v172 = vld [vmem:[%s1 + $0xac] sm:$0xf]
    %v173 = vld [vmem:[%s1 + $0xb0] sm:$0xf]
    %v174 = vld [vmem:[%s1 + $0xb4] sm:$0xf]
    %v175 = vld [vmem:[%s1 + $0xb8] sm:$0xf]
    %v176 = vld [vmem:[%s1 + $0xbc] sm:$0xf]
    %v177 = vld [vmem:[%s1 + $0xc0] sm:$0xf]
    %v178 = vld [vmem:[%s1 + $0xc4] sm:$0xf]
    %v179 = vld [vmem:[%s1 + $0xc8] sm:$0xf]
    %v180 = vld [vmem:[%s1 + $0xcc] sm:$0xf]
    %v181 = vld [vmem:[%s1 + $0xd0] sm:$0xf]
    %v182 = vld [vmem:[%s1 + $0xd4] sm:$0xf]
    %v183 = vld [vmem:[%s1 + $0xd8] sm:$0xf]
    %v184 = vld [vmem:[%s1 + $0xdc] sm:$0xf]
    %v185 = vld [vmem:[%s1 + $0xe0] sm:$0xf]
    %v186 = vld [vmem:[%s1 + $0xe4] sm:$0xf]
    %v187 = vld [vmem:[%s1 + $0xe8] sm:$0xf]
    %v188 = vld [vmem:[%s1 + $0xec] sm:$0xf]
    %v189 = vld [vmem:[%s1 + $0xf0] sm:$0xf]
    %v190 = vld [vmem:[%s1 + $0xf4] sm:$0xf]
    %v191 = vld [vmem:[%s1 + $0xf8] sm:$0xf]
    %v192 = vld [vmem:[%s1 + $0xfc] sm:$0xf]
    %v193 = vld [vmem:[%s1 + $0x100] sm:$0xf]
    %v194 = vld [vmem:[%s1 + $0x104] sm:$0xf]
    %v195 = vld [vmem:[%s1 + $0x108] sm:$0xf]
    %v196 = vld [vmem:[%s1 + $0x10c] sm:$0xf]
    %v197 = vld [vmem:[%s1 + $0x110] sm:$0xf]
    %v198 = vld [vmem:[%s1 + $0x114] sm:$0xf]
    %v199 = vld [vmem:[%s1 + $0x118] sm:$0xf]
    %v200 = vld [vmem:[%s1 + $0x11c] sm:$0xf]
    %v201 = vld [vmem:[%s1 + $0x120] sm:$0xf]
    %v202 = vld [vmem:[%s1 + $0x124] sm:$0xf]
    %v203 = vld [vmem:[%s1 + $0x128] sm:$0xf]
    %v204 = vld [vmem:[%s1 + $0x12c] sm:$0xf]
    %v205 = vld [vmem:[%s1 + $0x130] sm:$0xf]
    %v206 = vld [vmem:[%s1 + $0x134] sm:$0xf]
    %v207 = vld [vmem:[%s1 + $0x138] sm:$0xf]
    %v208 = vld [vmem:[%s1 + $0x13c] sm:$0xf]
    %v209 = vld [vmem:[%s1 + $0x140] sm:$0xf]
    %v210 = vld [vmem:[%s1 + $0x144] sm:$0xf]
    %v211 = vld [vmem:[%s1 + $0x148] sm:$0xf]
    %v212 = vld [vmem:[%s1 + $0x14c] sm:$0xf]
    %v213 = vld [vmem:[%s1 + $0x150] sm:$0xf]
    %v214 = vld [vmem:[%s1 + $0x154] sm:$0xf]
    %v215 = vld [vmem:[%s1 + $0x158] sm:$0xf]
    %v216 = vld [vmem:[%s1 + $0x15c] sm:$0xf]
    %v217 = vld [vmem:[%s1 + $0x160] sm:$0xf]
    %v218 = vld [vmem:[%s1 + $0x164] sm:$0xf]
    %v219 = vld [vmem:[%s1 + $0x168] sm:$0xf]
    %v220 = vld [vmem:[%s1 + $0x16c] sm:$0xf]
    %v221 = vld [vmem:[%s1 + $0x170] sm:$0xf]
    %v222 = vld [vmem:[%s1 + $0x174] sm:$0xf]
    %v223 = vld [vmem:[%s1 + $0x178] sm:$0xf]
    %v224 = vld [vmem:[%s1 + $0x17c] sm:$0xf]
    %v225 = vld [vmem:[%s1 + $0x180] sm:$0xf]
    %v226 = vld [vmem:[%s1 + $0x184] sm:$0xf]
    %v227 = vld [vmem:[%s2] sm:$0x1]
    %v229 = vlaneseq
    %v230 = vshrl.u32 %v229, 7
    %v231 = vsub.s32 0, %v230
    %v232 = vrot.slane %v227, %v231
    %v332 = vunpack.c.l.b16 %v129
    %v333 = vunpack.c.l.b16 %v130
    %v334 = vunpack.c.l.b16 %v131
    %v335 = vunpack.c.l.b16 %v132
    %v336 = vunpack.c.l.b16 %v133
    %v337 = vunpack.c.l.b16 %v134
    %v338 = vunpack.c.l.b16 %v135
    %v339 = vunpack.c.l.b16 %v136
    %v340 = vunpack.c.l.b16 %v137
    %v341 = vunpack.c.l.b16 %v138
    %v342 = vunpack.c.l.b16 %v139
    %v343 = vunpack.c.l.b16 %v140
    %v344 = vunpack.c.l.b16 %v141
    %v345 = vunpack.c.l.b16 %v142
    %v346 = vunpack.c.l.b16 %v143
    %v347 = vunpack.c.l.b16 %v144
    %v348 = vunpack.c.l.b16 %v145
    %v349 = vunpack.c.l.b16 %v146
    %v350 = vunpack.c.l.b16 %v147
    %v351 = vunpack.c.l.b16 %v148
    %v352 = vunpack.c.l.b16 %v149
    %v353 = vunpack.c.l.b16 %v150
    %v354 = vunpack.c.l.b16 %v151
    %v355 = vunpack.c.l.b16 %v152
    %v356 = vunpack.c.l.b16 %v153
    %v357 = vunpack.c.l.b16 %v154
    %v358 = vunpack.c.l.b16 %v155
    %v359 = vunpack.c.l.b16 %v156
    %v360 = vunpack.c.l.b16 %v157
    %v361 = vunpack.c.l.b16 %v158
    %v362 = vunpack.c.l.b16 %v159
    %v363 = vunpack.c.l.b16 %v160
    %v364 = vunpack.c.l.b16 %v161
    %v365 = vunpack.c.l.b16 %v162
    %v366 = vunpack.c.l.b16 %v163
    %v367 = vunpack.c.l.b16 %v164
    %v368 = vunpack.c.l.b16 %v165
    %v369 = vunpack.c.l.b16 %v166
    %v370 = vunpack.c.l.b16 %v167
    %v371 = vunpack.c.l.b16 %v168
    %v372 = vunpack.c.l.b16 %v169
    %v373 = vunpack.c.l.b16 %v170
    %v374 = vunpack.c.l.b16 %v171
    %v375 = vunpack.c.l.b16 %v172
    %v376 = vunpack.c.l.b16 %v173
    %v377 = vunpack.c.l.b16 %v174
    %v378 = vunpack.c.l.b16 %v175
    %v379 = vunpack.c.l.b16 %v176
    %v380 = vunpack.c.l.b16 %v177
    %v381 = vunpack.c.l.b16 %v178
    %v382 = vunpack.c.l.b16 %v179
    %v383 = vunpack.c.l.b16 %v180
    %v384 = vunpack.c.l.b16 %v181
    %v385 = vunpack.c.l.b16 %v182
    %v386 = vunpack.c.l.b16 %v183
    %v387 = vunpack.c.l.b16 %v184
    %v388 = vunpack.c.l.b16 %v185
    %v389 = vunpack.c.l.b16 %v186
    %v390 = vunpack.c.l.b16 %v187
    %v391 = vunpack.c.l.b16 %v188
    %v392 = vunpack.c.l.b16 %v189
    %v393 = vunpack.c.l.b16 %v190
    %v394 = vunpack.c.l.b16 %v191
    %v395 = vunpack.c.l.b16 %v192
    %v396 = vunpack.c.l.b16 %v193
    %v397 = vunpack.c.l.b16 %v194
    %v398 = vunpack.c.l.b16 %v195
    %v399 = vunpack.c.l.b16 %v196
    %v400 = vunpack.c.l.b16 %v197
    %v401 = vunpack.c.l.b16 %v198
    %v402 = vunpack.c.l.b16 %v199
    %v403 = vunpack.c.l.b16 %v200
    %v404 = vunpack.c.l.b16 %v201
    %v405 = vunpack.c.l.b16 %v202
    %v406 = vunpack.c.l.b16 %v203
    %v407 = vunpack.c.l.b16 %v204
    %v408 = vunpack.c.l.b16 %v205
    %v409 = vunpack.c.l.b16 %v206
    %v410 = vunpack.c.l.b16 %v207
    %v411 = vunpack.c.l.b16 %v208
    %v412 = vunpack.c.l.b16 %v209
    %v413 = vunpack.c.l.b16 %v210
    %v414 = vunpack.c.l.b16 %v211
    %v415 = vunpack.c.l.b16 %v212
    %v416 = vunpack.c.l.b16 %v213
    %v417 = vunpack.c.l.b16 %v214
    %v418 = vunpack.c.l.b16 %v215
    %v419 = vunpack.c.l.b16 %v216
    %v420 = vunpack.c.l.b16 %v217
    %v421 = vunpack.c.l.b16 %v218
    %v422 = vunpack.c.l.b16 %v219
    %v423 = vunpack.c.l.b16 %v220
    %v424 = vunpack.c.l.b16 %v221
    %v425 = vunpack.c.l.b16 %v222
    %v426 = vunpack.c.l.b16 %v223
    %v427 = vunpack.c.l.b16 %v224
    %v428 = vunpack.c.l.b16 %v225
    %v429 = vunpack.c.l.b16 %v226
    %v430 = vpack.c.b16 %v333, %v332
    %v431 = vpack.c.b16 %v335, %v334
    %v432 = vpack.c.b16 %v337, %v336
    %v433 = vpack.c.b16 %v339, %v338
    %v434 = vpack.c.b16 %v341, %v340
    %v435 = vpack.c.b16 %v343, %v342
    %v436 = vpack.c.b16 %v345, %v344
    %v437 = vpack.c.b16 %v347, %v346
    %v438 = vpack.c.b16 %v349, %v348
    %v439 = vpack.c.b16 %v351, %v350
    %v440 = vpack.c.b16 %v353, %v352
    %v441 = vpack.c.b16 %v355, %v354
    %v442 = vpack.c.b16 %v357, %v356
    %v443 = vpack.c.b16 %v359, %v358
    %v444 = vpack.c.b16 %v361, %v360
    %v445 = vpack.c.b16 %v363, %v362
    %v446 = vpack.c.b16 %v365, %v364
    %v447 = vpack.c.b16 %v367, %v366
    %v448 = vpack.c.b16 %v369, %v368
    %v449 = vpack.c.b16 %v371, %v370
    %v450 = vpack.c.b16 %v373, %v372
    %v451 = vpack.c.b16 %v375, %v374
    %v452 = vpack.c.b16 %v377, %v376
    %v453 = vpack.c.b16 %v379, %v378
    %v454 = vpack.c.b16 %v381, %v380
    %v455 = vpack.c.b16 %v383, %v382
    %v456 = vpack.c.b16 %v385, %v384
    %v457 = vpack.c.b16 %v387, %v386
    %v458 = vpack.c.b16 %v389, %v388
    %v459 = vpack.c.b16 %v391, %v390
    %v460 = vpack.c.b16 %v393, %v392
    %v461 = vpack.c.b16 %v395, %v394
    %v462 = vpack.c.b16 %v397, %v396
    %v463 = vpack.c.b16 %v399, %v398
    %v464 = vpack.c.b16 %v401, %v400
    %v465 = vpack.c.b16 %v403, %v402
    %v466 = vpack.c.b16 %v405, %v404
    %v467 = vpack.c.b16 %v407, %v406
    %v468 = vpack.c.b16 %v409, %v408
    %v469 = vpack.c.b16 %v411, %v410
    %v470 = vpack.c.b16 %v413, %v412
    %v471 = vpack.c.b16 %v415, %v414
    %v472 = vpack.c.b16 %v417, %v416
    %v473 = vpack.c.b16 %v419, %v418
    %v474 = vpack.c.b16 %v421, %v420
    %v475 = vpack.c.b16 %v423, %v422
    %v476 = vpack.c.b16 %v425, %v424
    %v477 = vpack.c.b16 %v427, %v426
    %v478 = vpack.c.b16 %v429, %v428
    %vm528 = vcmask 130048
    %v530 = vsel %vm528, %v128, 0
    %532 = vmatprep.subr.bf16.mxu0 0
    %533 = vmatpush1.bf16.msra.mxu0 %v430
    %534 = vmatprep.subr.bf16.mxu0 0
    %535 = vmatpush1.bf16.msra.mxu0 %v431
    %536 = vmatprep.subr.bf16.mxu0 0
    %537 = vmatpush1.bf16.msra.mxu0 %v432
    %538 = vmatprep.subr.bf16.mxu0 0
    %539 = vmatpush1.bf16.msra.mxu0 %v433
    %540 = vmatprep.subr.bf16.mxu0 0
    %541 = vmatpush1.bf16.msra.mxu0 %v434
    %542 = vmatprep.subr.bf16.mxu0 0
    %543 = vmatpush1.bf16.msra.mxu0 %v435
    %544 = vmatprep.subr.bf16.mxu0 0
    %545 = vmatpush1.bf16.msra.mxu0 %v436
    %546 = vmatprep.subr.bf16.mxu0 0
    %547 = vmatpush1.bf16.msra.mxu0 %v437
    %548 = vmatprep.subr.bf16.mxu0 0
    %549 = vmatpush1.bf16.msra.mxu0 %v438
    %550 = vmatprep.subr.bf16.mxu0 0
    %551 = vmatpush1.bf16.msra.mxu0 %v439
    %552 = vmatprep.subr.bf16.mxu0 0
    %553 = vmatpush1.bf16.msra.mxu0 %v440
    %554 = vmatprep.subr.bf16.mxu0 0
    %555 = vmatpush1.bf16.msra.mxu0 %v441
    %556 = vmatprep.subr.bf16.mxu0 0
    %557 = vmatpush1.bf16.msra.mxu0 %v442
    %558 = vmatprep.subr.bf16.mxu0 0
    %559 = vmatpush1.bf16.msra.mxu0 %v443
    %560 = vmatprep.subr.bf16.mxu0 0
    %561 = vmatpush1.bf16.msra.mxu0 %v444
    %562 = vmatprep.subr.bf16.mxu0 0
    %563 = vmatpush1.bf16.msra.mxu0 %v445
    %564 = vmatprep.mubr.bf16.mxu0 %v123
    %565 = vmatmul.mubr.bf16.gmra.mrb[0].mxu0 %v122
    %v566 = vpop.f32.mrb[0].mxu0
    %v567 = vadd.f32 %v232, %v566
    %v568 = vpop.f32.mrb[0].mxu0
    %v569 = vpop.f32.mrb[0].mxu0
    %v570 = vpop.f32.mrb[0].mxu0
    %571 = vdwg.mxu0
    %572 = vmatprep.subr.bf16.mxu0 0
    %573 = vmatpush1.bf16.msra.mxu0 %v446
    %574 = vmatprep.subr.bf16.mxu0 0
    %575 = vmatpush1.bf16.msra.mxu0 %v447
    %576 = vmatprep.subr.bf16.mxu0 0
    %577 = vmatpush1.bf16.msra.mxu0 %v448
    %578 = vmatprep.subr.bf16.mxu0 0
    %579 = vmatpush1.bf16.msra.mxu0 %v449
    %580 = vmatprep.subr.bf16.mxu0 0
    %581 = vmatpush1.bf16.msra.mxu0 %v450
    %582 = vmatprep.subr.bf16.mxu0 0
    %583 = vmatpush1.bf16.msra.mxu0 %v451
    %584 = vmatprep.subr.bf16.mxu0 0
    %585 = vmatpush1.bf16.msra.mxu0 %v452
    %586 = vmatprep.subr.bf16.mxu0 0
    %587 = vmatpush1.bf16.msra.mxu0 %v453
    %588 = vmatprep.subr.bf16.mxu0 0
    %589 = vmatpush1.bf16.msra.mxu0 %v454
    %590 = vmatprep.subr.bf16.mxu0 0
    %591 = vmatpush1.bf16.msra.mxu0 %v455
    %592 = vmatprep.subr.bf16.mxu0 0
    %593 = vmatpush1.bf16.msra.mxu0 %v456
    %594 = vmatprep.subr.bf16.mxu0 0
    %595 = vmatpush1.bf16.msra.mxu0 %v457
    %596 = vmatprep.subr.bf16.mxu0 0
    %597 = vmatpush1.bf16.msra.mxu0 %v458
    %598 = vmatprep.subr.bf16.mxu0 0
    %599 = vmatpush1.bf16.msra.mxu0 %v459
    %600 = vmatprep.subr.bf16.mxu0 0
    %601 = vmatpush1.bf16.msra.mxu0 %v460
    %602 = vmatprep.subr.bf16.mxu0 0
    %603 = vmatpush1.bf16.msra.mxu0 %v461
    %604 = vmatprep.mubr.bf16.mxu0 %v125
    %605 = vmatmul.mubr.bf16.gmra.mrb[0].mxu0 %v124
    %v606 = vpop.f32.mrb[0].mxu0
    %v607 = vadd.f32 %v567, %v606
    %v608 = vpop.f32.mrb[0].mxu0
    %v609 = vpop.f32.mrb[0].mxu0
    %v610 = vpop.f32.mrb[0].mxu0
    %611 = vdwg.mxu0
    %612 = vmatprep.subr.bf16.mxu0 0
    %613 = vmatpush1.bf16.msra.mxu0 %v462
    %614 = vmatprep.subr.bf16.mxu0 0
    %615 = vmatpush1.bf16.msra.mxu0 %v463
    %616 = vmatprep.subr.bf16.mxu0 0
    %617 = vmatpush1.bf16.msra.mxu0 %v464
    %618 = vmatprep.subr.bf16.mxu0 0
    %619 = vmatpush1.bf16.msra.mxu0 %v465
    %620 = vmatprep.subr.bf16.mxu0 0
    %621 = vmatpush1.bf16.msra.mxu0 %v466
    %622 = vmatprep.subr.bf16.mxu0 0
    %623 = vmatpush1.bf16.msra.mxu0 %v467
    %624 = vmatprep.subr.bf16.mxu0 0
    %625 = vmatpush1.bf16.msra.mxu0 %v468
    %626 = vmatprep.subr.bf16.mxu0 0
    %627 = vmatpush1.bf16.msra.mxu0 %v469
    %628 = vmatprep.subr.bf16.mxu0 0
    %629 = vmatpush1.bf16.msra.mxu0 %v470
    %630 = vmatprep.subr.bf16.mxu0 0
    %631 = vmatpush1.bf16.msra.mxu0 %v471
    %632 = vmatprep.subr.bf16.mxu0 0
    %633 = vmatpush1.bf16.msra.mxu0 %v472
    %634 = vmatprep.subr.bf16.mxu0 0
    %635 = vmatpush1.bf16.msra.mxu0 %v473
    %636 = vmatprep.subr.bf16.mxu0 0
    %637 = vmatpush1.bf16.msra.mxu0 %v474
    %638 = vmatprep.subr.bf16.mxu0 0
    %639 = vmatpush1.bf16.msra.mxu0 %v475
    %640 = vmatprep.subr.bf16.mxu0 0
    %641 = vmatpush1.bf16.msra.mxu0 %v476
    %642 = vmatprep.subr.bf16.mxu0 0
    %643 = vmatpush1.bf16.msra.mxu0 %v477
    %644 = vmatprep.mubr.bf16.mxu0 %v127
    %645 = vmatmul.mubr.bf16.gmra.mrb[0].mxu0 %v126
    %v646 = vpop.f32.mrb[0].mxu0
    %v647 = vadd.f32 %v607, %v646
    %v648 = vpop.f32.mrb[0].mxu0
    %v649 = vpop.f32.mrb[0].mxu0
    %v650 = vpop.f32.mrb[0].mxu0
    %651 = vdwg.mxu0
    %652 = vmatprep.subr.bf16.mxu0 0
    %653 = vmatpush1.bf16.msra.mxu0 %v478
    %654 = vmatprep.subr.bf16.mxu0 0
    %655 = vmatpush1.bf16.msra.mxu0 0
    %656 = vmatprep.subr.bf16.mxu0 0
    %657 = vmatpush1.bf16.msra.mxu0 0
    %658 = vmatprep.subr.bf16.mxu0 0
    %659 = vmatpush1.bf16.msra.mxu0 0
    %660 = vmatprep.subr.bf16.mxu0 0
    %661 = vmatpush1.bf16.msra.mxu0 0
    %662 = vmatprep.subr.bf16.mxu0 0
    %663 = vmatpush1.bf16.msra.mxu0 0
    %664 = vmatprep.subr.bf16.mxu0 0
    %665 = vmatpush1.bf16.msra.mxu0 0
    %666 = vmatprep.subr.bf16.mxu0 0
    %667 = vmatpush1.bf16.msra.mxu0 0
    %668 = vmatprep.subr.bf16.mxu0 0
    %669 = vmatpush1.bf16.msra.mxu0 0
    %670 = vmatprep.subr.bf16.mxu0 0
    %671 = vmatpush1.bf16.msra.mxu0 0
    %672 = vmatprep.subr.bf16.mxu0 0
    %673 = vmatpush1.bf16.msra.mxu0 0
    %674 = vmatprep.subr.bf16.mxu0 0
    %675 = vmatpush1.bf16.msra.mxu0 0
    %676 = vmatprep.subr.bf16.mxu0 0
    %677 = vmatpush1.bf16.msra.mxu0 0
    %678 = vmatprep.subr.bf16.mxu0 0
    %679 = vmatpush1.bf16.msra.mxu0 0
    %680 = vmatprep.subr.bf16.mxu0 0
    %681 = vmatpush1.bf16.msra.mxu0 0
    %682 = vmatprep.subr.bf16.mxu0 0
    %683 = vmatpush1.bf16.msra.mxu0 0
    %684 = vmatprep.mubr.bf16.mxu0 0
    %685 = vmatmul.mubr.bf16.gmra.mrb[0].mxu0 %v530
    %v686 = vpop.f32.mrb[0].mxu0
    %v687 = vadd.f32 %v647, %v686
    %v688 = vpop.f32.mrb[0].mxu0
    %v689 = vpop.f32.mrb[0].mxu0
    %v690 = vpop.f32.mrb[0].mxu0
    %691 = vdwg.mxu0
    %v692 = vmax.f32 %v687, 0.0
    %v693 = vld [vmem:[%s3] sm:$0xff]
    %v694 = vld [vmem:[%s3 + $0x8] sm:$0xff]
    %v695 = vld [vmem:[%s3 + $0x10] sm:$0xff]
    %v696 = vld [vmem:[%s3 + $0x18] sm:$0xff]
    %v697 = vld [vmem:[%s3 + $0x20] sm:$0xff]
    %v698 = vld [vmem:[%s3 + $0x28] sm:$0xff]
    %v699 = vld [vmem:[%s3 + $0x30] sm:$0xff]
    %v700 = vld [vmem:[%s3 + $0x38] sm:$0xff]
    %v701 = vld [vmem:[%s4] sm:$0x1]
    %v703 = vlaneseq
    %v704 = vshrl.u32 %v703, 7
    %v705 = vsub.s32 0, %v704
    %v706 = vrot.slane %v701, %v705
    %vm708 = vcmask 523264
    %v710 = vsel %vm708, %v692, 0
    %712 = vmatprep.subr.mxu0 0.0
    %713 = vmatpush1.msra.mxu0 %v693
    %714 = vmatprep.subr.mxu0 0.0
    %715 = vmatpush1.msra.mxu0 %v694
    %716 = vmatprep.subr.mxu0 0.0
    %717 = vmatpush1.msra.mxu0 %v695
    %718 = vmatprep.subr.mxu0 0.0
    %719 = vmatpush1.msra.mxu0 %v696
    %720 = vmatprep.subr.mxu0 0.0
    %721 = vmatpush1.msra.mxu0 %v697
    %722 = vmatprep.subr.mxu0 0.0
    %723 = vmatpush1.msra.mxu0 %v698
    %724 = vmatprep.subr.mxu0 0.0
    %725 = vmatpush1.msra.mxu0 %v699
    %726 = vmatprep.subr.mxu0 0.0
    %727 = vmatpush1.msra.mxu0 %v700
    %728 = vmatprep.subr.mxu0 0.0
    %729 = vmatpush1.msra.mxu0 0.0
    %730 = vmatprep.subr.mxu0 0.0
    %731 = vmatpush1.msra.mxu0 0.0
    %732 = vmatprep.subr.mxu0 0.0
    %733 = vmatpush1.msra.mxu0 0.0
    %734 = vmatprep.subr.mxu0 0.0
    %735 = vmatpush1.msra.mxu0 0.0
    %736 = vmatprep.subr.mxu0 0.0
    %737 = vmatpush1.msra.mxu0 0.0
    %738 = vmatprep.subr.mxu0 0.0
    %739 = vmatpush1.msra.mxu0 0.0
    %740 = vmatprep.subr.mxu0 0.0
    %741 = vmatpush1.msra.mxu0 0.0
    %742 = vmatprep.subr.mxu0 0.0
    %743 = vmatpush1.msra.mxu0 0.0
    %744 = vmatprep.subr.mxu0 0.0
    %745 = vmatpush1.msra.mxu0 0.0
    %746 = vmatprep.subr.mxu0 0.0
    %747 = vmatpush1.msra.mxu0 0.0
    %748 = vmatprep.subr.mxu0 0.0
    %749 = vmatpush1.msra.mxu0 0.0
    %750 = vmatprep.subr.mxu0 0.0
    %751 = vmatpush1.msra.mxu0 0.0
    %752 = vmatprep.subr.mxu0 0.0
    %753 = vmatpush1.msra.mxu0 0.0
    %754 = vmatprep.subr.mxu0 0.0
    %755 = vmatpush1.msra.mxu0 0.0
    %756 = vmatprep.subr.mxu0 0.0
    %757 = vmatpush1.msra.mxu0 0.0
    %758 = vmatprep.subr.mxu0 0.0
    %759 = vmatpush1.msra.mxu0 0.0
    %760 = vmatprep.subr.mxu0 0.0
    %761 = vmatpush1.msra.mxu0 0.0
    %762 = vmatprep.subr.mxu0 0.0
    %763 = vmatpush1.msra.mxu0 0.0
    %764 = vmatprep.subr.mxu0 0.0
    %765 = vmatpush1.msra.mxu0 0.0
    %766 = vmatprep.subr.mxu0 0.0
    %767 = vmatpush1.msra.mxu0 0.0
    %768 = vmatprep.subr.mxu0 0.0
    %769 = vmatpush1.msra.mxu0 0.0
    %770 = vmatprep.subr.mxu0 0.0
    %771 = vmatpush1.msra.mxu0 0.0
    %772 = vmatprep.subr.mxu0 0.0
    %773 = vmatpush1.msra.mxu0 0.0
    %774 = vmatprep.subr.mxu0 0.0
    %775 = vmatpush1.msra.mxu0 0.0
    %776 = vmatprep.mubr.f32.mxu0 0.0
    %777 = vmatmul.mubr.f32.gmra.mrb[0].mxu0 %v710
    %v778 = vpop.f32.mrb[0].mxu0
    %v779 = vadd.f32 %v706, %v778
    %v780 = vpop.f32.mrb[0].mxu0
    %781 = vdwg.mxu0
    %v782 = vmax.f32 %v779, 0.0
    %v783 = vld [vmem:[%s5] sm:$0xff]
    %v784 = vld [vmem:[%s5 + $0x8] sm:$0xff]
    %v785 = vld [vmem:[%s5 + $0x10] sm:$0xff]
    %v786 = vld [vmem:[%s5 + $0x18] sm:$0xff]
    %v787 = vld [vmem:[%s6] sm:$0x1]
    %v789 = vlaneseq
    %v790 = vshrl.u32 %v789, 7
    %v791 = vsub.s32 0, %v790
    %v792 = vrot.slane %v787, %v791
    %vm794 = vcmask 261120
    %v796 = vsel %vm794, %v782, 0
    %798 = vmatprep.subr.mxu0 0.0
    %799 = vmatpush1.msra.mxu0 %v783
    %800 = vmatprep.subr.mxu0 0.0
    %801 = vmatpush1.msra.mxu0 %v784
    %802 = vmatprep.subr.mxu0 0.0
    %803 = vmatpush1.msra.mxu0 %v785
    %804 = vmatprep.subr.mxu0 0.0
    %805 = vmatpush1.msra.mxu0 %v786
    %806 = vmatprep.subr.mxu0 0.0
    %807 = vmatpush1.msra.mxu0 0.0
    %808 = vmatprep.subr.mxu0 0.0
    %809 = vmatpush1.msra.mxu0 0.0
    %810 = vmatprep.subr.mxu0 0.0
    %811 = vmatpush1.msra.mxu0 0.0
    %812 = vmatprep.subr.mxu0 0.0
    %813 = vmatpush1.msra.mxu0 0.0
    %814 = vmatprep.subr.mxu0 0.0
    %815 = vmatpush1.msra.mxu0 0.0
    %816 = vmatprep.subr.mxu0 0.0
    %817 = vmatpush1.msra.mxu0 0.0
    %818 = vmatprep.subr.mxu0 0.0
    %819 = vmatpush1.msra.mxu0 0.0
    %820 = vmatprep.subr.mxu0 0.0
    %821 = vmatpush1.msra.mxu0 0.0
    %822 = vmatprep.subr.mxu0 0.0
    %823 = vmatpush1.msra.mxu0 0.0
    %824 = vmatprep.subr.mxu0 0.0
    %825 = vmatpush1.msra.mxu0 0.0
    %826 = vmatprep.subr.mxu0 0.0
    %827 = vmatpush1.msra.mxu0 0.0
    %828 = vmatprep.subr.mxu0 0.0
    %829 = vmatpush1.msra.mxu0 0.0
    %830 = vmatprep.subr.mxu0 0.0
    %831 = vmatpush1.msra.mxu0 0.0
    %832 = vmatprep.subr.mxu0 0.0
    %833 = vmatpush1.msra.mxu0 0.0
    %834 = vmatprep.subr.mxu0 0.0
    %835 = vmatpush1.msra.mxu0 0.0
    %836 = vmatprep.subr.mxu0 0.0
    %837 = vmatpush1.msra.mxu0 0.0
    %838 = vmatprep.subr.mxu0 0.0
    %839 = vmatpush1.msra.mxu0 0.0
    %840 = vmatprep.subr.mxu0 0.0
    %841 = vmatpush1.msra.mxu0 0.0
    %842 = vmatprep.subr.mxu0 0.0
    %843 = vmatpush1.msra.mxu0 0.0
    %844 = vmatprep.subr.mxu0 0.0
    %845 = vmatpush1.msra.mxu0 0.0
    %846 = vmatprep.subr.mxu0 0.0
    %847 = vmatpush1.msra.mxu0 0.0
    %848 = vmatprep.subr.mxu0 0.0
    %849 = vmatpush1.msra.mxu0 0.0
    %850 = vmatprep.subr.mxu0 0.0
    %851 = vmatpush1.msra.mxu0 0.0
    %852 = vmatprep.subr.mxu0 0.0
    %853 = vmatpush1.msra.mxu0 0.0
    %854 = vmatprep.subr.mxu0 0.0
    %855 = vmatpush1.msra.mxu0 0.0
    %856 = vmatprep.subr.mxu0 0.0
    %857 = vmatpush1.msra.mxu0 0.0
    %858 = vmatprep.subr.mxu0 0.0
    %859 = vmatpush1.msra.mxu0 0.0
    %860 = vmatprep.subr.mxu0 0.0
    %861 = vmatpush1.msra.mxu0 0.0
    %862 = vmatprep.mubr.f32.mxu0 0.0
    %863 = vmatmul.mubr.f32.gmra.mrb[0].mxu0 %v796
    %v864 = vpop.f32.mrb[0].mxu0
    %v865 = vadd.f32 %v792, %v864
    %v866 = vpop.f32.mrb[0].mxu0
    %867 = vdwg.mxu0
    %vm868 = vcmask 80896
    %869 = vst.msk [vmem:[#allocation2] sm:$0xff] %vm868, %v865
    // Predicated region
    $region30: #{net_forward.1} parent=1 // pred_check
      _
    $region31: #{net_forward.1} parent=1 // pred_check_branch
      %871 = sbr.rel (0) target = $region33
    $region32: #{net_forward.1} parent=1 // pred_region
      %s873 = ssub.s32 128, 32
      %874 = vsyncadd [#allocation3], %s873
      %s875 = sshll.u32 [#allocation2], 4
      %s876 = int_to_ptr.vmem [resolvable:$true] %s875
      %881 = dma.vmem_to_hbm [thread:$0]  %s876, 32, %s7, [#allocation3], 32, 32, 2
    $region33: #{net_forward.1} parent=1 // pred_fallthru
      _
    // Predicated region
    $region34: #{net_forward.1} parent=1 // pred_check
      _
    $region35: #{net_forward.1} parent=1 // pred_check_branch
      %883 = sbr.rel (0) target = $region37
    $region36: #{net_forward.1} parent=1 // pred_region
      %884 = dma.done [#allocation3], 128
    $region37: #{net_forward.1} parent=1 // pred_fallthru
      _
    %885 = vsyncpa [#allocation3], 1

</llo_original>
